<compile_context>
chip_gen: v5e
topology: v5e:2x2
jax: 0.10.0
libtpu: 0.0.40
codegen_flags: <defaults>
</compile_context>

<pallas_src>
import functools

import jax
import jax.numpy as jnp
from jax import lax
from jax.experimental import pallas as pl
from jax.experimental.pallas import tpu as pltpu


def _round_up(x, m):
    return (x + m - 1) // m * m


def _sublane_multiple(itemsize):
    # f32 -> 8, bf16 -> 16, int8/fp8 -> 32 (packed rows per sublane).
    return 8 * max(1, 4 // max(1, itemsize))


def _choose_tile_n(n, c, itemsize):
    sub = _sublane_multiple(itemsize)
    c_pad = _round_up(c, 128)
    # Per-row VMEM bytes:
    #   2 x pred input buffer (double-buffered, lane-padded to 128)
    # + 2 x (row, 1) int32 target buffer (lane-padded to 128 lanes)
    # + ~2 x one f32 row of in-kernel temporaries (exp values / weighted pass)
    per_row = 2 * c_pad * itemsize + 2 * 128 * 4 + 2 * c_pad * 4
    budget = 20 * 1024 * 1024            # total working-set target (~20 MiB)
    rows_budget = budget // per_row
    rows_cap = (4 * 1024 * 1024) // max(1, c * itemsize)   # ~4 MiB pred tile cap
    rows = max(sub, min(rows_budget, rows_cap) // sub * sub)
    return int(min(rows, _round_up(n, sub)))


def _label_smooth_kernel(pred_ref, tgt_ref, out_ref, *,
                         n_total, c_total, tile_n, smooth_val, confidence):
    # pred_ref: (tile_n, C) native dtype; tgt_ref: (tile_n, 1) int32;
    # out_ref:  (1, 8, 128) f32 lane-dense partial-sum slab for this tile.
    pred_nat = pred_ref[...]                       # keep native dtype (bf16 OK)
    tn, c = pred_nat.shape

    # Row max in the native dtype (exact for bf16); widen only where needed.
    m = jnp.max(pred_nat, axis=-1, keepdims=True).astype(jnp.float32)   # (tn,1)

    # Numerically stable log-sum-exp along the class axis (f32 math).
    exp_vals = jnp.exp(pred_nat.astype(jnp.float32) - m)                # (tn,c)
    lse = jnp.log(jnp.sum(exp_vals, axis=-1, keepdims=True)) + m        # (tn,1)

    # Fused weighted reduction.  Since sum_j true_dist_j == 1:
    #   row_loss = lse - sum_j( true_dist_j * pred_j )
    col = lax.broadcasted_iota(jnp.int32, (1, c), 1)          # (1,c), not (tn,c)
    w = jnp.where(col == tgt_ref[...],                        # broadcast (tn,c)
                  jnp.float32(confidence), jnp.float32(smooth_val))
    wsum = jnp.sum(w * pred_nat.astype(jnp.float32), axis=-1, keepdims=True)
    row_loss = lse - wsum                                                # (tn,1)

    if n_total % tile_n != 0:
        # Mask batch-padding rows out of the partial sum (last tile only).
        row_idx = (pl.program_id(0) * tile_n
                   + lax.broadcasted_iota(jnp.int32, (tn, 1), 0))
        row_loss = jnp.where(row_idx < n_total, row_loss, 0.0)

    tile_sum = jnp.sum(row_loss)
    # Lane-dense, fully aligned (8,128) store; value replicated, read back at [0,0].
    out_ref[...] = jnp.broadcast_to(tile_sum, out_ref.shape).astype(jnp.float32)

    # TODO(synk): the PyTorch module prints `true_dist` (host-side debug print);
    # intentionally omitted.


def label_smoothing_loss_v1(pred, target, *, classes, smoothing=0.0,
                            weight=None, tile_n=None):
    """Pallas TPU implementation of LabelSmoothingLossv1.forward (weight=None path)."""
    assert 0.0 <= smoothing < 1.0
    assert weight is None  # TODO(synk): per-class weight branch not implemented (module default is None)
    n, c = pred.shape
    assert c == classes

    confidence = 1.0 - smoothing
    smooth_val = smoothing / (classes - 1)      # uses GLOBAL class count
    itemsize = jnp.dtype(pred.dtype).itemsize
    sub = _sublane_multiple(itemsize)

    if tile_n is None:
        tile_n = _choose_tile_n(n, c, itemsize)
    else:
        tile_n = max(sub, _round_up(int(tile_n), sub))

    n_pad = _round_up(n, tile_n)
    num_tiles = n_pad // tile_n

    # Pad the batch only; padded rows are masked inside the kernel.
    if n_pad != n:
        pred_in = jnp.pad(pred, ((0, n_pad - n), (0, 0)))
        tgt_in = jnp.pad(target.astype(jnp.int32), (0, n_pad - n),
                         constant_values=-1)
    else:
        pred_in = pred                           # native dtype: no wrapper-side f32 cast
        tgt_in = target.astype(jnp.int32)
    tgt_2d = tgt_in.reshape(n_pad, 1)

    # TODO(synk): vocabulary-scale C would need a second ("arbitrary") grid axis
    # over classes with an online-LSE accumulator; not needed at these sizes.
    # TODO(synk): on v7x, verify with xprof that the batch axis shards across both
    # TensorCores; if one TC idles, switch axis 0 to pltpu.CORE_PARALLEL.
    kernel = functools.partial(
        _label_smooth_kernel, n_total=n, c_total=c, tile_n=tile_n,
        smooth_val=smooth_val, confidence=confidence)

    partials = pl.pallas_call(
        kernel,
        out_shape=jax.ShapeDtypeStruct((num_tiles, 8, 128), jnp.float32),
        grid=(num_tiles,),
        in_specs=[
            pl.BlockSpec((tile_n, c), lambda i: (i, 0)),   # pred tile (auto-pipelined)
            pl.BlockSpec((tile_n, 1), lambda i: (i, 0)),   # targets (lane-padded, budgeted)
        ],
        out_specs=pl.BlockSpec((1, 8, 128), lambda i: (i, 0, 0)),
        compiler_params=pltpu.CompilerParams(
            dimension_semantics=("parallel",),             # shards tiles across TCs
            vmem_limit_bytes=40 * 1024 * 1024),            # > v5e's 16 MiB default, < v7x physical
    )(pred_in, tgt_2d)

    return jnp.sum(partials[:, 0, 0]) / jnp.float32(n)


def _reference(pred, target, classes, smoothing):
    # Pure-JAX reference mirroring the PyTorch module.
    confidence = 1.0 - smoothing
    logp = jax.nn.log_softmax(pred.astype(jnp.float32), axis=-1)
    true_dist = jnp.full_like(logp, smoothing / (classes - 1))
    true_dist = true_dist.at[jnp.arange(pred.shape[0]), target].set(confidence)
    return jnp.mean(jnp.sum(-true_dist * logp, axis=-1))


if __name__ == "__main__":
    key = jax.random.PRNGKey(0)
    k1, k2, k3, k4 = jax.random.split(key, 4)

    # Case 1: single tile, f32 input.
    N, C, smoothing = 8, 32, 0.1
    pred = jax.random.normal(k1, (N, C), dtype=jnp.float32)
    target = jax.random.randint(k2, (N,), 0, C, dtype=jnp.int32)
    loss = jax.block_until_ready(
        label_smoothing_loss_v1(pred, target, classes=C, smoothing=smoothing))
    ref = _reference(pred, target, C, smoothing)
    assert jnp.allclose(loss, ref, atol=1e-4, rtol=1e-4), (loss, ref)

    # Case 2: multiple batch tiles + batch padding + bf16 input read natively.
    N2, C2, smoothing2 = 20, 32, 0.2
    pred2 = jax.random.normal(k3, (N2, C2), dtype=jnp.float32).astype(jnp.bfloat16)
    target2 = jax.random.randint(k4, (N2,), 0, C2, dtype=jnp.int32)
    loss2 = jax.block_until_ready(
        label_smoothing_loss_v1(pred2, target2, classes=C2,
                                smoothing=smoothing2, tile_n=16))
    ref2 = _reference(pred2.astype(jnp.float32), target2, C2, smoothing2)
    assert jnp.allclose(loss2, ref2, atol=1e-4, rtol=1e-4), (loss2, ref2)

    # Case 3: smoothing == 0 (pure one-hot cross entropy path).
    loss3 = jax.block_until_ready(
        label_smoothing_loss_v1(pred, target, classes=C, smoothing=0.0))
    ref3 = _reference(pred, target, C, 0.0)
    assert jnp.allclose(loss3, ref3, atol=1e-4, rtol=1e-4), (loss3, ref3)

    print("KERNEL_OK")
</pallas_src>

<mosaic_0001>
module attributes {stable_mosaic.version = 11 : i64} {
  func.func @_label_smooth_kernel(%arg0: i32, %arg1: memref<8x32xf32, #tpu.memory_space<vmem>>, %arg2: memref<8x1xi32, #tpu.memory_space<vmem>>, %arg3: memref<1x8x128xf32, #tpu.memory_space<vmem>>) attributes {dimension_semantics = [#tpu.dimension_semantics<parallel>], iteration_bounds = array<i64: 1>, scalar_prefetch = 0 : i64, scratch_operands = 0 : i64, tpu.core_type = #tpu.core_type<tc>, window_params = [{transform_indices = @transform_0, window_bounds = array<i64: 8, 32>}, {transform_indices = @transform_1, window_bounds = array<i64: 8, 1>}, {transform_indices = @transform_2, window_bounds = array<i64: 1, 8, 128>}]} {
    %c0 = arith.constant 0 : index
    %c0_0 = arith.constant 0 : index
    %0 = vector.load %arg1[%c0, %c0_0] : memref<8x32xf32, #tpu.memory_space<vmem>>, vector<8x32xf32>
    %cst = arith.constant dense<0xFF800000> : vector<8xf32>
    %1 = vector.multi_reduction <maximumf>, %0, %cst [1] : vector<8x32xf32> to vector<8xf32>
    %2 = vector.shape_cast %1 : vector<8xf32> to vector<8x1xf32>
    %3 = vector.broadcast %2 : vector<8x1xf32> to vector<8x32xf32>
    %4 = arith.subf %0, %3 : vector<8x32xf32>
    %5 = math.exp %4 : vector<8x32xf32>
    %cst_1 = arith.constant dense<0.000000e+00> : vector<8xf32>
    %6 = vector.multi_reduction <add>, %5, %cst_1 [1] : vector<8x32xf32> to vector<8xf32>
    %7 = vector.shape_cast %6 : vector<8xf32> to vector<8x1xf32>
    %8 = math.log %7 : vector<8x1xf32>
    %9 = arith.addf %8, %2 : vector<8x1xf32>
    %10 = tpu.iota {dimensions = array<i32: 1>} : vector<1x32xi32>
    %c0_2 = arith.constant 0 : index
    %c0_3 = arith.constant 0 : index
    %11 = vector.load %arg2[%c0_2, %c0_3] : memref<8x1xi32, #tpu.memory_space<vmem>>, vector<8x1xi32>
    %12 = vector.broadcast %10 : vector<1x32xi32> to vector<8x32xi32>
    %13 = vector.broadcast %11 : vector<8x1xi32> to vector<8x32xi32>
    %14 = arith.cmpi eq, %12, %13 : vector<8x32xi32>
    %cst_4 = arith.constant 0.899999976 : f32
    %cst_5 = arith.constant 0.0032258064 : f32
    %15 = vector.broadcast %cst_4 : f32 to vector<8x32xf32>
    %16 = vector.broadcast %cst_5 : f32 to vector<8x32xf32>
    %17 = arith.select %14, %15, %16 : vector<8x32xi1>, vector<8x32xf32>
    %18 = arith.mulf %17, %0 : vector<8x32xf32>
    %cst_6 = arith.constant dense<0.000000e+00> : vector<8xf32>
    %19 = vector.multi_reduction <add>, %18, %cst_6 [1] : vector<8x32xf32> to vector<8xf32>
    %20 = vector.shape_cast %19 : vector<8xf32> to vector<8x1xf32>
    %21 = arith.subf %9, %20 : vector<8x1xf32>
    %22 = vector.shape_cast %21 : vector<8x1xf32> to vector<1x8x1xf32>
    %cst_7 = arith.constant dense<0.000000e+00> : vector<1xf32>
    %23 = vector.multi_reduction <add>, %22, %cst_7 [1, 2] : vector<1x8x1xf32> to vector<1xf32>
    %24 = vector.shape_cast %23 : vector<1xf32> to vector<1x1x1xf32>
    %25 = vector.extract %24[0, 0, 0] : f32 from vector<1x1x1xf32>
    %26 = vector.broadcast %25 : f32 to vector<1x8x128xf32>
    %c0_8 = arith.constant 0 : index
    %c0_9 = arith.constant 0 : index
    %c0_10 = arith.constant 0 : index
    %27 = vector.load %arg3[%c0_8, %c0_9, %c0_10] : memref<1x8x128xf32, #tpu.memory_space<vmem>>, vector<1x8x128xf32>
    tpu.vector_store %arg3[%c0_8, %c0_9, %c0_10], %26 {strides = array<i32>} : memref<1x8x128xf32, #tpu.memory_space<vmem>>, vector<1x8x128xf32>,
    return
  }
  func.func @transform_0(%arg0: i32) -> (i32, i32) {
    %c0_i32 = arith.constant 0 : i32
    %c0_i32_0 = arith.constant 0 : i32
    return %arg0, %c0_i32 : i32, i32
  }
  func.func @transform_1(%arg0: i32) -> (i32, i32) {
    %c0_i32 = arith.constant 0 : i32
    %c0_i32_0 = arith.constant 0 : i32
    return %arg0, %c0_i32 : i32, i32
  }
  func.func @transform_2(%arg0: i32) -> (i32, i32, i32) {
    %c0_i32 = arith.constant 0 : i32
    %c0_i32_0 = arith.constant 0 : i32
    %c0_i32_1 = arith.constant 0 : i32
    return %arg0, %c0_i32, %c0_i32_0 : i32, i32, i32
  }
}

</mosaic_0001>

<llo_original>
// kernel: tpu_custom_call.1
$region0: #{tpu_custom_call.1}
  #allocation0 [shape = 'u32[]', space=smem, size = 0x4, offset = 0x4, fixed_abs, tag = 'smem constant byte address 0x4 - core index']
  #allocation1 [shape = 'u32[72,128]{1,0:T(1,128)}', space=vmem, size = 0x9000, scoped, tag = 'internal scratch']
  %s0 = inlined_call_operand.vmem [shape: f32[8,32], index: 0, kind: input, shape index: {}]
  %s1 = inlined_call_operand.vmem [shape: s32[8,1], index: 1, kind: input, shape index: {}]
  %s2 = inlined_call_operand.hbm [shape: f32[1,8,128], index: 2, kind: output, shape index: {}]
  %s3 = sld [smem:[#allocation0]]
  $region18: #{tpu_custom_call.1} parent=0
    _
  %s5 = ssub.s32 1, %s3
  %s6 = scalar_select 0, %s5, %s3
  $region1: #{tpu_custom_call.1} parent=0
    #allocation2 [shape = 'u8[4096]{0}', space=vmem, size = 0x1000, scoped, tag = 'output window, operand 0, single buffered']
    #allocation3 [shape = 's32[1]{0}', space=sflag, size = 0x4, scoped, tag = 'scoped memory for tpu_custom_call.1']
    %7 = vsyncpa [#allocation3], 0
    // Predicated region
    $region2: #{tpu_custom_call.1} parent=1 // pred_check
      _
    $region3: #{tpu_custom_call.1} parent=1 // pred_check_branch
      %9 = sbr.rel (0) target = $region5
    $region4: #{tpu_custom_call.1} parent=1 // pred_region
      _
    $region5: #{tpu_custom_call.1} parent=1 // pred_fallthru
      _
    // Predicated region
    $region6: #{tpu_custom_call.1} parent=1 // pred_check
      _
    $region7: #{tpu_custom_call.1} parent=1 // pred_check_branch
      %11 = sbr.rel (0) target = $region9
    $region8: #{tpu_custom_call.1} parent=1 // pred_region
      _
    $region9: #{tpu_custom_call.1} parent=1 // pred_fallthru
      _
    %v12 = vld [vmem:[%s0] sm:$0xff]
    %vm13 = vcmask 261120
    %v14 = vsel %vm13, %v12, -inf
    %15 = vmax.xlane.f32.xlu0 %v14
    %v16 = vpop.xlane.xlu0 %15
    %v17 = vsub.f32 %v12, %v16
    %v18 = vmul.f32 %v17, 1.442695
    %v19 = vpow.pop %v18
    %v20 = vsel %vm13, %v19, 0.0
    %21 = vadd.xlane.f32.xlu0 %v20
    %v22 = vpop.xlane.xlu0 %21
    %v23 = vlog2.pop %v22
    %v24 = vmul.f32 %v23, 0.6931472
    %v25 = vadd.f32 %v24, %v16
    %v26 = vlaneseq
    %v27 = vand.u32 %v26, 127
    %v28 = vld [vmem:[%s1] sm:$0xff]
    %29 = vset.pattern.permute.xlu0 0
    %30 = vperm.xlu0 %29, %v28
    %v31 = vpop.permute.xlu0 %30
    %vm32 = vcmp.eq.s32.totalorder %v27, %v31
    %v33 = vsel %vm32, 0.9, 0.0032258064
    %v34 = vmul.f32 %v33, %v12
    %v35 = vsel %vm13, %v34, 0.0
    %36 = vadd.xlane.f32.xlu0 %v35
    %v37 = vpop.xlane.xlu0 %36
    %v38 = vsub.f32 %v25, %v37
    %vm39 = vcmask 7168
    %v40 = vsel %vm39, %v38, 0.0
    %41 = vadd.xlane.f32.xlu0 %v40
    %v42 = vpop.xlane.xlu0 %41
    %v43 = vrot.slane %v42, 4
    %v44 = vadd.f32 %v42, %v43
    %v45 = vrot.slane %v44, 2
    %v46 = vadd.f32 %v44, %v45
    %v47 = vrot.slane %v46, 1
    %v48 = vadd.f32 %v46, %v47
    %s49 = vtos %v48
    %v50 = vstv %s49
    %51 = vst [vmem:[#allocation2] sm:$0xff] %v50
    // Predicated region
    $region10: #{tpu_custom_call.1} parent=1 // pred_check
      _
    $region11: #{tpu_custom_call.1} parent=1 // pred_check_branch
      %53 = sbr.rel (0) target = $region13
    $region12: #{tpu_custom_call.1} parent=1 // pred_region
      %55 = vsyncadd [#allocation3], 0
      %s57 = sshll.u32 [#allocation2], 4
      %s58 = int_to_ptr.vmem [resolvable:$true] %s57
      %s59 = sshll.u32 %s2, 4
      %s60 = int_to_ptr.hbm [resolvable:$true] %s59
      %62 = dma.vmem_to_hbm [thread:$0]  %s58, 128, %s60, [#allocation3]
    $region13: #{tpu_custom_call.1} parent=1 // pred_fallthru
      _
    // Predicated region
    $region14: #{tpu_custom_call.1} parent=1 // pred_check
      _
    $region15: #{tpu_custom_call.1} parent=1 // pred_check_branch
      %64 = sbr.rel (0) target = $region17
    $region16: #{tpu_custom_call.1} parent=1 // pred_region
      %66 = dma.done [#allocation3], 128
    $region17: #{tpu_custom_call.1} parent=1 // pred_fallthru
      _
    %67 = vsyncpa [#allocation3], 1

</llo_original>
